<compile_context>
chip_gen: v7x
topology: tpu7x:2x2x1
jax: 0.10.0
libtpu: 0.0.40
codegen_flags: <defaults>
</compile_context>

<pallas_src>
import functools

import jax
import jax.numpy as jnp
from jax import lax
from jax.experimental import pallas as pl
from jax.experimental.pallas import tpu as pltpu


def residual_dw_kernel(x_ref, wb_ref, m_ref, o_ref, *, W, compute_dtype):
    # x_ref:  (Cblk, HW)  flattened-spatial input tile (lane-dense, HW on lanes)
    # wb_ref: (Cblk, 16)  cols 0..8 = BN-fused taps (center tap carries the +1 residual),
    #                     col 9 = BN-fused bias, cols 10..15 zero padding
    # m_ref:  (4, HW)     row 0: zero col W-1 (pre-mask for dx=-1 sources)
    #                     row 1: zero col 0   (pre-mask for dx=+1 sources)
    #                     row 2: zero row 0   (post-mask for the dy=-1 partial)
    #                     row 3: zero row H-1 (post-mask for the dy=+1 partial)
    HW = x_ref.shape[-1]
    xc = x_ref[...].astype(compute_dtype)

    def tap(k):
        # (Cblk, 1) — broadcast over lanes
        return wb_ref[:, k:k + 1].astype(compute_dtype)

    mask_l = m_ref[0:1, :]            # (1, HW) — broadcast over sublanes
    mask_r = m_ref[1:2, :]
    mask_t = m_ref[2:3, :]
    mask_b = m_ref[3:4, :]

    # Pre-masked sources: kill the column that would leak across the left/right image border.
    xl = xc * mask_l                  # source for all dx = -1 taps
    xr = xc * mask_r                  # source for all dx = +1 taps

    def sh(src, dy, dx):
        # shifted[p] = src_flat[p + dy*W + dx] — lane rotation on the XLU; the wraparound /
        # cross-row junk is exactly what the pre/post masks remove.
        return pltpu.roll(src, shift=(-(dy * W + dx)) % HW, axis=1)

    # dy = 0 row (center tap includes the folded +1 residual).
    acc = tap(4) * xc + tap(3) * sh(xl, 0, -1) + tap(5) * sh(xr, 0, 1)
    # dy = -1 row (reads the row above) — invalid at output row 0.
    p_top = tap(0) * sh(xl, -1, -1) + tap(1) * sh(xc, -1, 0) + tap(2) * sh(xr, -1, 1)
    # dy = +1 row (reads the row below) — invalid at output row H-1.
    p_bot = tap(6) * sh(xl, 1, -1) + tap(7) * sh(xc, 1, 0) + tap(8) * sh(xr, 1, 1)

    acc = acc + mask_t * p_top + mask_b * p_bot + tap(9)   # tap(9) == BN-fused bias
    o_ref[...] = acc.astype(o_ref.dtype)                   # single fused, lane-dense store


def _vmem_budget():
    """(per-tile byte cap, vmem_limit_bytes) sized per TPU generation."""
    vmem_bytes = 128 * 1024 * 1024
    try:
        info = pltpu.get_tpu_info()
        vmem_bytes = getattr(info, "vmem_capacity_bytes", vmem_bytes)
    except Exception:
        pass
    if vmem_bytes <= 64 * 1024 * 1024:           # v7x: 64 MiB per TensorCore — keep headroom
        return 4 * 1024 * 1024, 40 * 1024 * 1024
    return 8 * 1024 * 1024, 64 * 1024 * 1024     # v5e / v6e: 128 MiB physical VMEM


def _choose_channel_block(C, HW, itemsize, tile_cap_bytes, want_min_blocks):
    """Largest legal channel block with one (Cblk, HW) tile under tile_cap_bytes.

    Legal blocks: divisors of C that are multiples of 8, or C itself (full extent)."""
    candidates = [C] + [cb for cb in range(8, C, 8) if C % cb == 0]
    fitting = [cb for cb in candidates if cb * HW * itemsize <= tile_cap_bytes]
    if want_min_blocks > 1:
        # Megacore: prefer a split that yields >=2 parallel grid points along channels.
        split = [cb for cb in fitting if C // cb >= want_min_blocks]
        if split:
            return max(split)
    if fitting:
        return max(fitting)
    # Nothing fits the cap: take the smallest legal block (least VMEM overshoot).
    # TODO(synk): for awkward C x HW combos (no multiple-of-8 divisor), split along HW instead.
    return min(candidates)


def residual_conv2d_bn(x, w_fused, b_fused):
    """x: (N, C, H, W); w_fused: (C, 9) BN-fused depthwise taps (row-major dy,dx);
    b_fused: (C,) or (C, 1) BN-fused bias. Returns x + dwconv3x3_bn(x)."""
    N, C, H, W = x.shape
    HW = H * W
    compute_dtype = jnp.bfloat16 if x.dtype == jnp.bfloat16 else jnp.float32

    # Wrapper-side layout plumbing (free reshapes / tiny constants), no extra data passes.
    x_flat = x.reshape(N, C, HW)

    # Fold the residual into the fused center tap (same identity add Residual.fuse() performs),
    # then pack 9 taps + bias into one lane-dense (C, 16) side array.
    w_res = jnp.asarray(w_fused).at[:, 4].add(1.0)
    wb = jnp.zeros((C, 16), x.dtype)
    wb = wb.at[:, :9].set(w_res.astype(x.dtype))
    wb = wb.at[:, 9].set(jnp.asarray(b_fused).reshape(C).astype(x.dtype))

    # 4 factorized {0,1} boundary masks implementing the pad=1 zero padding.
    col_idx = jnp.tile(jnp.arange(W, dtype=jnp.int32), H)        # (HW,) column of each flat pos
    row_idx = jnp.repeat(jnp.arange(H, dtype=jnp.int32), W)      # (HW,) row of each flat pos
    masks = jnp.stack(
        [
            (col_idx < W - 1),   # zero col W-1  (dx = -1 source pre-mask)
            (col_idx > 0),       # zero col 0    (dx = +1 source pre-mask)
            (row_idx > 0),       # zero row 0    (dy = -1 partial post-mask)
            (row_idx < H - 1),   # zero row H-1  (dy = +1 partial post-mask)
        ],
        axis=0,
    ).astype(compute_dtype)                                      # (4, HW)

    tile_cap, vmem_limit = _vmem_budget()
    want_min_blocks = 2 if N == 1 else 1                         # keep both v7x cores busy
    cblk = _choose_channel_block(C, HW, jnp.dtype(x.dtype).itemsize, tile_cap, want_min_blocks)
    grid = (N, C // cblk)

    kernel = functools.partial(residual_dw_kernel, W=W, compute_dtype=compute_dtype)

    out_flat = pl.pallas_call(
        kernel,
        out_shape=jax.ShapeDtypeStruct((N, C, HW), x.dtype),
        grid_spec=pltpu.PrefetchScalarGridSpec(
            num_scalar_prefetch=0,
            grid=grid,
            in_specs=[
                pl.BlockSpec((pl.Squeezed(), cblk, HW), lambda n, c: (n, c, 0)),
                pl.BlockSpec((cblk, 16), lambda n, c: (c, 0)),
                pl.BlockSpec((4, HW), lambda n, c: (0, 0)),
            ],
            out_specs=pl.BlockSpec((pl.Squeezed(), cblk, HW), lambda n, c: (n, c, 0)),
        ),
        compiler_params=pltpu.CompilerParams(
            dimension_semantics=("parallel", "parallel"),
            vmem_limit_bytes=vmem_limit,
        ),
    )(x_flat, wb, masks)
    return out_flat.reshape(N, C, H, W)

# TODO(synk): for RepViT stages with HW < 128 (7x7 / 14x14), a channels-on-lanes (HW, C) layout
# with sublane rolls would restore full lane density; not needed at the HW >= 128 test shape.


def reference(x, conv_w, gamma, beta, mean, var, eps=1e-5):
    """Pure-JAX reference: x + BN(depthwise_conv3x3(x)), NCHW."""
    C = x.shape[1]
    y = lax.conv_general_dilated(
        x, conv_w,
        window_strides=(1, 1), padding=((1, 1), (1, 1)),
        dimension_numbers=("NCHW", "OIHW", "NCHW"),
        feature_group_count=C,
    )
    scale = gamma / jnp.sqrt(var + eps)
    bias = beta - mean * scale
    y = y * scale[None, :, None, None] + bias[None, :, None, None]
    return x + y


if __name__ == "__main__":
    key = jax.random.PRNGKey(0)
    N, C, H, W = 2, 4, 16, 16
    eps = 1e-5

    k_x, k_w, k_g, k_b, k_m, k_v = jax.random.split(key, 6)
    x = jax.random.normal(k_x, (N, C, H, W), jnp.float32)

    # Conv2d(C, C, 3, 1, 1, groups=C, bias=False) weight: (C, 1, 3, 3)
    conv_w = jax.random.normal(k_w, (C, 1, 3, 3), jnp.float32) * 0.1
    # BatchNorm2d(C) running stats / affine params (perturbed deterministically)
    gamma = 1.0 + 0.1 * jax.random.normal(k_g, (C,), jnp.float32)
    beta = 0.1 * jax.random.normal(k_b, (C,), jnp.float32)
    running_mean = 0.1 * jax.random.normal(k_m, (C,), jnp.float32)
    running_var = 1.0 + 0.1 * jax.random.uniform(k_v, (C,), jnp.float32)

    # Fold BN into the depthwise conv (inference fusion, as in Conv2d_BN.fuse)
    scale = gamma / jnp.sqrt(running_var + eps)                      # (C,)
    w_fused = (conv_w[:, 0] * scale[:, None, None]).reshape(C, 9)    # (C, 9)
    b_fused = beta - running_mean * scale                            # (C,)

    # TODO(synk): training-mode stochastic drop-path branch (torch.rand gate) is not part of
    # the inference forward and is not implemented in the kernel.
    out = residual_conv2d_bn(x, w_fused, b_fused)
    out = jax.block_until_ready(out)

    ref = reference(x, conv_w, gamma, beta, running_mean, running_var, eps)
    assert out.shape == (N, C, H, W)
    assert jnp.allclose(out, ref, atol=1e-4, rtol=1e-4), "mismatch vs reference"

    print("KERNEL_OK")
</pallas_src>

<mosaic_0001>
module attributes {stable_mosaic.version = 11 : i64} {
  func.func @residual_dw_kernel(%arg0: i32, %arg1: i32, %arg2: memref<1x4x256xf32, #tpu.memory_space<vmem>>, %arg3: memref<4x16xf32, #tpu.memory_space<vmem>>, %arg4: memref<4x256xf32, #tpu.memory_space<vmem>>, %arg5: memref<1x4x256xf32, #tpu.memory_space<vmem>>) attributes {dimension_semantics = [#tpu.dimension_semantics<parallel>, #tpu.dimension_semantics<parallel>], iteration_bounds = array<i64: 2, 1>, scalar_prefetch = 0 : i64, scratch_operands = 0 : i64, tpu.core_type = #tpu.core_type<tc>, window_params = [{transform_indices = @transform_0, window_bounds = array<i64: 1, 4, 256>}, {transform_indices = @transform_1, window_bounds = array<i64: 4, 16>}, {pipeline_mode = #tpu.pipeline_mode<synchronous>, transform_indices = @transform_2, window_bounds = array<i64: 4, 256>}, {transform_indices = @transform_3, window_bounds = array<i64: 1, 4, 256>}]} {
    %c0 = arith.constant 0 : index
    %c0_0 = arith.constant 0 : index
    %c0_1 = arith.constant 0 : index
    %0 = vector.load %arg2[%c0, %c0_0, %c0_1] : memref<1x4x256xf32, #tpu.memory_space<vmem>>, vector<1x4x256xf32>
    %1 = vector.shape_cast %0 : vector<1x4x256xf32> to vector<4x256xf32>
    %c0_2 = arith.constant 0 : index
    %c0_3 = arith.constant 0 : index
    %2 = vector.load %arg4[%c0_2, %c0_3] : memref<4x256xf32, #tpu.memory_space<vmem>>, vector<1x256xf32>
    %c1 = arith.constant 1 : index
    %c0_4 = arith.constant 0 : index
    %3 = vector.load %arg4[%c1, %c0_4] : memref<4x256xf32, #tpu.memory_space<vmem>>, vector<1x256xf32>
    %c2 = arith.constant 2 : index
    %c0_5 = arith.constant 0 : index
    %4 = vector.load %arg4[%c2, %c0_5] : memref<4x256xf32, #tpu.memory_space<vmem>>, vector<1x256xf32>
    %c3 = arith.constant 3 : index
    %c0_6 = arith.constant 0 : index
    %5 = vector.load %arg4[%c3, %c0_6] : memref<4x256xf32, #tpu.memory_space<vmem>>, vector<1x256xf32>
    %6 = vector.broadcast %2 : vector<1x256xf32> to vector<4x256xf32>
    %7 = arith.mulf %1, %6 : vector<4x256xf32>
    %8 = vector.broadcast %3 : vector<1x256xf32> to vector<4x256xf32>
    %9 = arith.mulf %1, %8 : vector<4x256xf32>
    %c0_7 = arith.constant 0 : index
    %c4 = arith.constant 4 : index
    %10 = vector.load %arg3[%c0_7, %c4] : memref<4x16xf32, #tpu.memory_space<vmem>>, vector<4x1xf32>
    %11 = vector.broadcast %10 : vector<4x1xf32> to vector<4x256xf32>
    %12 = arith.mulf %11, %1 : vector<4x256xf32>
    %c0_8 = arith.constant 0 : index
    %c3_9 = arith.constant 3 : index
    %13 = vector.load %arg3[%c0_8, %c3_9] : memref<4x16xf32, #tpu.memory_space<vmem>>, vector<4x1xf32>
    %c1_i32 = arith.constant 1 : i32
    %14 = tpu.dynamic_rotate %7 by %c1_i32 dim 1 : vector<4x256xf32>, i32 -> vector<4x256xf32>
    %15 = vector.broadcast %13 : vector<4x1xf32> to vector<4x256xf32>
    %16 = arith.mulf %15, %14 : vector<4x256xf32>
    %17 = arith.addf %12, %16 : vector<4x256xf32>
    %c0_10 = arith.constant 0 : index
    %c5 = arith.constant 5 : index
    %18 = vector.load %arg3[%c0_10, %c5] : memref<4x16xf32, #tpu.memory_space<vmem>>, vector<4x1xf32>
    %c255_i32 = arith.constant 255 : i32
    %19 = tpu.dynamic_rotate %9 by %c255_i32 dim 1 : vector<4x256xf32>, i32 -> vector<4x256xf32>
    %20 = vector.broadcast %18 : vector<4x1xf32> to vector<4x256xf32>
    %21 = arith.mulf %20, %19 : vector<4x256xf32>
    %22 = arith.addf %17, %21 : vector<4x256xf32>
    %c0_11 = arith.constant 0 : index
    %c0_12 = arith.constant 0 : index
    %23 = vector.load %arg3[%c0_11, %c0_12] : memref<4x16xf32, #tpu.memory_space<vmem>>, vector<4x1xf32>
    %c17_i32 = arith.constant 17 : i32
    %24 = tpu.dynamic_rotate %7 by %c17_i32 dim 1 : vector<4x256xf32>, i32 -> vector<4x256xf32>
    %25 = vector.broadcast %23 : vector<4x1xf32> to vector<4x256xf32>
    %26 = arith.mulf %25, %24 : vector<4x256xf32>
    %c0_13 = arith.constant 0 : index
    %c1_14 = arith.constant 1 : index
    %27 = vector.load %arg3[%c0_13, %c1_14] : memref<4x16xf32, #tpu.memory_space<vmem>>, vector<4x1xf32>
    %c16_i32 = arith.constant 16 : i32
    %28 = tpu.dynamic_rotate %1 by %c16_i32 dim 1 : vector<4x256xf32>, i32 -> vector<4x256xf32>
    %29 = vector.broadcast %27 : vector<4x1xf32> to vector<4x256xf32>
    %30 = arith.mulf %29, %28 : vector<4x256xf32>
    %31 = arith.addf %26, %30 : vector<4x256xf32>
    %c0_15 = arith.constant 0 : index
    %c2_16 = arith.constant 2 : index
    %32 = vector.load %arg3[%c0_15, %c2_16] : memref<4x16xf32, #tpu.memory_space<vmem>>, vector<4x1xf32>
    %c15_i32 = arith.constant 15 : i32
    %33 = tpu.dynamic_rotate %9 by %c15_i32 dim 1 : vector<4x256xf32>, i32 -> vector<4x256xf32>
    %34 = vector.broadcast %32 : vector<4x1xf32> to vector<4x256xf32>
    %35 = arith.mulf %34, %33 : vector<4x256xf32>
    %36 = arith.addf %31, %35 : vector<4x256xf32>
    %c0_17 = arith.constant 0 : index
    %c6 = arith.constant 6 : index
    %37 = vector.load %arg3[%c0_17, %c6] : memref<4x16xf32, #tpu.memory_space<vmem>>, vector<4x1xf32>
    %c241_i32 = arith.constant 241 : i32
    %38 = tpu.dynamic_rotate %7 by %c241_i32 dim 1 : vector<4x256xf32>, i32 -> vector<4x256xf32>
    %39 = vector.broadcast %37 : vector<4x1xf32> to vector<4x256xf32>
    %40 = arith.mulf %39, %38 : vector<4x256xf32>
    %c0_18 = arith.constant 0 : index
    %c7 = arith.constant 7 : index
    %41 = vector.load %arg3[%c0_18, %c7] : memref<4x16xf32, #tpu.memory_space<vmem>>, vector<4x1xf32>
    %c240_i32 = arith.constant 240 : i32
    %42 = tpu.dynamic_rotate %1 by %c240_i32 dim 1 : vector<4x256xf32>, i32 -> vector<4x256xf32>
    %43 = vector.broadcast %41 : vector<4x1xf32> to vector<4x256xf32>
    %44 = arith.mulf %43, %42 : vector<4x256xf32>
    %45 = arith.addf %40, %44 : vector<4x256xf32>
    %c0_19 = arith.constant 0 : index
    %c8 = arith.constant 8 : index
    %46 = vector.load %arg3[%c0_19, %c8] : memref<4x16xf32, #tpu.memory_space<vmem>>, vector<4x1xf32>
    %c239_i32 = arith.constant 239 : i32
    %47 = tpu.dynamic_rotate %9 by %c239_i32 dim 1 : vector<4x256xf32>, i32 -> vector<4x256xf32>
    %48 = vector.broadcast %46 : vector<4x1xf32> to vector<4x256xf32>
    %49 = arith.mulf %48, %47 : vector<4x256xf32>
    %50 = arith.addf %45, %49 : vector<4x256xf32>
    %51 = vector.broadcast %4 : vector<1x256xf32> to vector<4x256xf32>
    %52 = arith.mulf %51, %36 : vector<4x256xf32>
    %53 = arith.addf %22, %52 : vector<4x256xf32>
    %54 = vector.broadcast %5 : vector<1x256xf32> to vector<4x256xf32>
    %55 = arith.mulf %54, %50 : vector<4x256xf32>
    %56 = arith.addf %53, %55 : vector<4x256xf32>
    %c0_20 = arith.constant 0 : index
    %c9 = arith.constant 9 : index
    %57 = vector.load %arg3[%c0_20, %c9] : memref<4x16xf32, #tpu.memory_space<vmem>>, vector<4x1xf32>
    %58 = vector.broadcast %57 : vector<4x1xf32> to vector<4x256xf32>
    %59 = arith.addf %56, %58 : vector<4x256xf32>
    %c0_21 = arith.constant 0 : index
    %c0_22 = arith.constant 0 : index
    %c0_23 = arith.constant 0 : index
    %60 = vector.load %arg5[%c0_21, %c0_22, %c0_23] : memref<1x4x256xf32, #tpu.memory_space<vmem>>, vector<1x4x256xf32>
    %61 = vector.shape_cast %60 : vector<1x4x256xf32> to vector<4x256xf32>
    %62 = vector.shape_cast %59 : vector<4x256xf32> to vector<1x4x256xf32>
    tpu.vector_store %arg5[%c0_21, %c0_22, %c0_23], %62 {strides = array<i32>} : memref<1x4x256xf32, #tpu.memory_space<vmem>>, vector<1x4x256xf32>,
    return
  }
  func.func @transform_0(%arg0: i32, %arg1: i32) -> (i32, i32, i32) {
    %c0_i32 = arith.constant 0 : i32
    %c0_i32_0 = arith.constant 0 : i32
    return %arg0, %arg1, %c0_i32 : i32, i32, i32
  }
  func.func @transform_1(%arg0: i32, %arg1: i32) -> (i32, i32) {
    %c0_i32 = arith.constant 0 : i32
    %c0_i32_0 = arith.constant 0 : i32
    return %arg1, %c0_i32 : i32, i32
  }
  func.func @transform_2(%arg0: i32, %arg1: i32) -> (i32, i32) {
    %c0_i32 = arith.constant 0 : i32
    %c0_i32_0 = arith.constant 0 : i32
    %c0_i32_1 = arith.constant 0 : i32
    return %c0_i32, %c0_i32_0 : i32, i32
  }
  func.func @transform_3(%arg0: i32, %arg1: i32) -> (i32, i32, i32) {
    %c0_i32 = arith.constant 0 : i32
    %c0_i32_0 = arith.constant 0 : i32
    return %arg0, %arg1, %c0_i32 : i32, i32, i32
  }
}

</mosaic_0001>

<llo_original>
// kernel: tpu_custom_call.1
$region0: #{tpu_custom_call.1}
  #allocation0 [shape = 'u32[]', space=smem, size = 0x4, offset = 0x4, fixed_abs, tag = 'smem constant byte address 0x4 - core index']
  #allocation1 [shape = 'u32[144,128]{1,0:T(1,128)}', space=vmem, size = 0x12000, scoped, tag = 'internal scratch']
  %s0 = inlined_call_operand.hbm [shape: f32[2,4,256], index: 0, kind: input, shape index: {}]
  %s1 = inlined_call_operand.hbm [shape: f32[4,16], index: 1, kind: input, shape index: {}]
  %s2 = inlined_call_operand.hbm [shape: f32[4,256], index: 2, kind: input, shape index: {}]
  %s3 = inlined_call_operand.hbm [shape: f32[2,4,256], index: 3, kind: output, shape index: {}]
  %s4 = sld [smem:[#allocation0]]
  $region57: #{tpu_custom_call.1} parent=0
    _
  %s6 = ssub.s32 1, %s4
  %s7 = scalar_select 0, %s6, %s4
  $region1: #{tpu_custom_call.1} parent=0
    #allocation2 [shape = 'u8[8192]{0}', space=vmem, size = 0x2000, scoped, tag = 'input window, operand 0']
    #allocation3 [shape = 's32[2]{0}', space=sflag, size = 0x8, scoped, tag = 'scoped memory for tpu_custom_call.1']
    #allocation4 [shape = 's32[2]{0}', space=sflag, size = 0x8, scoped, tag = 'scoped memory for tpu_custom_call.1']
    #allocation5 [shape = 'u8[2048]{0}', space=vmem, size = 0x800, scoped, tag = 'input window, operand 1, single buffered']
    #allocation6 [shape = 's32[1]{0}', space=sflag, size = 0x4, scoped, tag = 'scoped memory for tpu_custom_call.1']
    #allocation7 [shape = 'u8[4096]{0}', space=vmem, size = 0x1000, scoped, tag = 'input window, operand 2, single buffered']
    #allocation8 [shape = 'u8[8192]{0}', space=vmem, size = 0x2000, scoped, tag = 'output window, operand 0']
    %8 = vsyncpa [#allocation3], 0
    %s9 = scalar_lea.sflag [#allocation3], 1
    %10 = vsyncpa %s9, 0
    %11 = vsyncpa [#allocation6], 0
    %12 = vsyncpa [#allocation4], 0
    %s13 = scalar_lea.sflag [#allocation4], 1
    %14 = vsyncpa %s13, 0
    loop: start=0, step=1, limit=4
    $region2: #{tpu_custom_call.1} parent=1 // loop_pre_header
      _
    $region3: #{tpu_custom_call.1} parent=1 // loop_header
      %s16 = sphi 0, %s20
      %p17 = scmp.ge.s32.totalorder %s16, 4
      %s23 = sphi 0, %s35
      %s24 = sphi 0, %s31
      %s25 = sphi 0, %s23
      %s26 = sphi 0, %s24
      %s27 = sphi 0, %s25
      %s28 = sphi 0, %s26
      %s40 = sphi 0, %s42
      %s43 = sphi 0, %s40
      %s44 = sphi 0, %s43
      %s60 = sphi 0, %s44
      %s66 = sphi 0, %s68
      %s69 = sphi 0, %s66
      %s70 = sphi 0, %s69
      %s86 = sphi 0, %s70
      %s90 = sphi 0, %s90
      %s92 = sphi 0, %s90
      %s93 = sphi 0, %s92
      %s107 = sphi 0, %s93
      %s115 = sphi 0, %s117
      %s118 = sphi 0, %s115
      %s119 = sphi 0, %s118
      %s135 = sphi 0, %s119
    $region4: #{tpu_custom_call.1} parent=1 // loop_header_branch
      %19 = sbr.rel (%p17) target = $region8
    $region5: #{tpu_custom_call.1} parent=1 // loop_body
      %s21 = ssub.s32 %s16, 1
      %s22 = ssub.s32 %s16, 2
      %s29 = sadd.s32 1, %s24
      %p30 = scmp.ge.s32.totalorder %s29, 1
      %s31 = scalar_select %p30, 0, %s29
      %s32 = sadd.s32 1, %s23
      %s33 = scalar_select %p30, %s32, %s23
      %p34 = scmp.ge.s32.totalorder %s33, 2
      %s35 = scalar_select %p34, 0, %s33
      %s36 = ssub.s32 %s23, %s35
      %s37 = ssub.s32 %s24, %s31
      %s38 = sor.u32 %s36, %s37
      %p39 = scmp.eq.s32.totalorder %s38, 0
      %s41 = sadd.s32 %s40, 1
      %s42 = scalar_select %p39, %s40, %s41
      %p45 = pneg %p39
      %p46 = scmp.eq.s32.totalorder %s16, 1
      %p47 = por %p45, %p46
      %p48 = scmp.ne.s32.totalorder %s40, %s43
      %p49 = scmp.eq.s32.totalorder %s16, 0
      %p50 = por %p48, %p49
      %p51 = scmp.ne.s32.totalorder %s40, %s43
      %p52 = scmp.eq.s32.totalorder %s21, 1
      %p53 = por %p51, %p52
      %p54 = scmp.ne.s32.totalorder %s43, %s44
      %p55 = scmp.eq.s32.totalorder %s21, 0
      %p56 = por %p54, %p55
      %p57 = scmp.ne.s32.totalorder %s43, %s44
      %p58 = scmp.eq.s32.totalorder %s22, 1
      %p59 = por %p57, %p58
      %p61 = scmp.ne.s32.totalorder %s44, %s60
      %p62 = scmp.eq.s32.totalorder %s22, 0
      %p63 = por %p61, %p62
      %s64 = ssub.s32 %s24, %s31
      %p65 = scmp.eq.s32.totalorder %s64, 0
      %s67 = sadd.s32 %s66, 1
      %s68 = scalar_select %p65, %s66, %s67
      %p71 = pneg %p65
      %p72 = scmp.eq.s32.totalorder %s16, 1
      %p73 = por %p71, %p72
      %p74 = scmp.ne.s32.totalorder %s66, %s69
      %p75 = scmp.eq.s32.totalorder %s16, 0
      %p76 = por %p74, %p75
      %p77 = scmp.ne.s32.totalorder %s66, %s69
      %p78 = scmp.eq.s32.totalorder %s21, 1
      %p79 = por %p77, %p78
      %p80 = scmp.ne.s32.totalorder %s69, %s70
      %p81 = scmp.eq.s32.totalorder %s21, 0
      %p82 = por %p80, %p81
      %p83 = scmp.ne.s32.totalorder %s69, %s70
      %p84 = scmp.eq.s32.totalorder %s22, 1
      %p85 = por %p83, %p84
      %p87 = scmp.ne.s32.totalorder %s70, %s86
      %p88 = scmp.eq.s32.totalorder %s22, 0
      %p89 = por %p87, %p88
      %s91 = sadd.s32 %s90, 1
      %p94 = scmp.eq.s32.totalorder %s16, 1
      %p95 = scmp.ne.s32.totalorder %s90, %s92
      %p96 = scmp.eq.s32.totalorder %s16, 0
      %p97 = por %p95, %p96
      %p98 = scmp.ne.s32.totalorder %s90, %s92
      %p99 = scmp.eq.s32.totalorder %s21, 1
      %p100 = por %p98, %p99
      %p101 = scmp.ne.s32.totalorder %s92, %s93
      %p102 = scmp.eq.s32.totalorder %s21, 0
      %p103 = por %p101, %p102
      %p104 = scmp.ne.s32.totalorder %s92, %s93
      %p105 = scmp.eq.s32.totalorder %s22, 1
      %p106 = por %p104, %p105
      %p108 = scmp.ne.s32.totalorder %s93, %s107
      %p109 = scmp.eq.s32.totalorder %s22, 0
      %p110 = por %p108, %p109
      %s111 = ssub.s32 %s23, %s35
      %s112 = ssub.s32 %s24, %s31
      %s113 = sor.u32 %s111, %s112
      %p114 = scmp.eq.s32.totalorder %s113, 0
      %s116 = sadd.s32 %s115, 1
      %s117 = scalar_select %p114, %s115, %s116
      %p120 = pneg %p114
      %p121 = scmp.eq.s32.totalorder %s16, 1
      %p122 = por %p120, %p121
      %p123 = scmp.ne.s32.totalorder %s115, %s118
      %p124 = scmp.eq.s32.totalorder %s16, 0
      %p125 = por %p123, %p124
      %p126 = scmp.ne.s32.totalorder %s115, %s118
      %p127 = scmp.eq.s32.totalorder %s21, 1
      %p128 = por %p126, %p127
      %p129 = scmp.ne.s32.totalorder %s118, %s119
      %p130 = scmp.eq.s32.totalorder %s21, 0
      %p131 = por %p129, %p130
      %p132 = scmp.ne.s32.totalorder %s118, %s119
      %p133 = scmp.eq.s32.totalorder %s22, 1
      %p134 = por %p132, %p133
      %p136 = scmp.ne.s32.totalorder %s119, %s135
      %p137 = scmp.eq.s32.totalorder %s22, 0
      %p138 = por %p136, %p137
      %p139 = scmp.le.s32.totalorder 1, %s16
      %p140 = scmp.lt.s32.totalorder %s16, 3
      %p141 = pnand %p139, %p140
      %p142 = pneg %p141
      // Predicated region
      $region9: #{tpu_custom_call.1} parent=5 // pred_check
        _
      $region10: #{tpu_custom_call.1} parent=5 // pred_check_branch
        %144 = sbr.rel (%p141) target = $region12
      $region11: #{tpu_custom_call.1} parent=5 // pred_region
        %s145 = ssub.s32 %s16, 1
        // Predicated region
        $region13: #{tpu_custom_call.1} parent=11 // pred_check
          %p146 = pneg %p82
        $region14: #{tpu_custom_call.1} parent=11 // pred_check_branch
          %148 = sbr.rel (%p146) target = $region16
        $region15: #{tpu_custom_call.1} parent=11 // pred_region
          %s150 = ssub.s32 64, 64
          %151 = vsyncadd [#allocation6], %s150
          %s152 = smul.addr %s26, 64
          %s153 = scalar_lea.hbm %s1, %s152
          %s155 = sshll.u32 [#allocation5], 4
          %s156 = int_to_ptr.vmem [resolvable:$true] %s155
          %158 = dma.hbm_to_vmem [thread:$0]  %s153, 64, %s156, [#allocation6]
        $region16: #{tpu_custom_call.1} parent=11 // pred_fallthru
          _
        // Predicated region
        $region17: #{tpu_custom_call.1} parent=11 // pred_check
          %p159 = pneg %p103
        $region18: #{tpu_custom_call.1} parent=11 // pred_check_branch
          %161 = sbr.rel (%p159) target = $region20
        $region19: #{tpu_custom_call.1} parent=11 // pred_region
          %s163 = ssub.s32 128, 128
          %164 = vsyncadd [#allocation6], %s163
          %s166 = sshll.u32 [#allocation7], 4
          %s167 = int_to_ptr.vmem [resolvable:$true] %s166
          %169 = dma.hbm_to_vmem [thread:$0]  %s2, 128, %s167, [#allocation6]
        $region20: #{tpu_custom_call.1} parent=11 // pred_fallthru
          _
      $region12: #{tpu_custom_call.1} parent=5 // pred_fallthru
        _
      %p170 = scmp.lt.s32.totalorder %s16, 2
      // Predicated region
      $region21: #{tpu_custom_call.1} parent=5 // pred_check
        %p171 = pneg %p170
      $region22: #{tpu_custom_call.1} parent=5 // pred_check_branch
        %173 = sbr.rel (%p171) target = $region24
      $region23: #{tpu_custom_call.1} parent=5 // pred_region
        // Predicated region
        $region25: #{tpu_custom_call.1} parent=23 // pred_check
          %p174 = pneg %p50
        $region26: #{tpu_custom_call.1} parent=23 // pred_check_branch
          %176 = sbr.rel (%p174) target = $region28
        $region27: #{tpu_custom_call.1} parent=23 // pred_region
          %s177 = sand.u32 %s40, 1
          %s178 = scalar_lea.sflag [#allocation3], %s177
          %s179 = sand.u32 %s40, 1
          %s180 = smul.addr %s179, 8
          %s181 = scalar_lea.vmem [#allocation2], %s180
          %s183 = ssub.s32 128, 128
          %184 = vsyncadd %s178, %s183
          %s185 = smul.addr %s24, 2
          %s186 = smul.addr %s23, 2
          %s187 = sadd.s32 %s185, %s186
          %s188 = smul.addr %s187, 64
          %s189 = scalar_lea.hbm %s0, %s188
          %s191 = sshll.u32 %s181, 4
          %s192 = int_to_ptr.vmem [resolvable:$true] %s191
          %194 = dma.hbm_to_vmem [thread:$0]  %s189, 128, %s192, %s178
        $region28: #{tpu_custom_call.1} parent=23 // pred_fallthru
          _
      $region24: #{tpu_custom_call.1} parent=5 // pred_fallthru
        _
      %p195 = scmp.le.s32.totalorder 1, %s16
      %p196 = scmp.lt.s32.totalorder %s16, 3
      %p197 = pnand %p195, %p196
      %p198 = pneg %p197
      // Predicated region
      $region29: #{tpu_custom_call.1} parent=5 // pred_check
        _
      $region30: #{tpu_custom_call.1} parent=5 // pred_check_branch
        %200 = sbr.rel (%p197) target = $region32
      $region31: #{tpu_custom_call.1} parent=5 // pred_region
        %s201 = ssub.s32 %s16, 1
        %s202 = sand.u32 %s43, 1
        %s203 = scalar_lea.sflag [#allocation3], %s202
        %s204 = sand.u32 %s43, 1
        %s205 = smul.addr %s204, 8
        %s206 = scalar_lea.vmem [#allocation2], %s205
        // Predicated region
        $region33: #{tpu_custom_call.1} parent=31 // pred_check
          %p207 = pneg %p56
        $region34: #{tpu_custom_call.1} parent=31 // pred_check_branch
          %209 = sbr.rel (%p207) target = $region36
        $region35: #{tpu_custom_call.1} parent=31 // pred_region
          %210 = dma.done %s203, 128
        $region36: #{tpu_custom_call.1} parent=31 // pred_fallthru
          _
        // Predicated region
        $region37: #{tpu_custom_call.1} parent=31 // pred_check
          %p211 = pneg %p82
        $region38: #{tpu_custom_call.1} parent=31 // pred_check_branch
          %213 = sbr.rel (%p211) target = $region40
        $region39: #{tpu_custom_call.1} parent=31 // pred_region
          %214 = dma.done [#allocation6], 64
        $region40: #{tpu_custom_call.1} parent=31 // pred_fallthru
          _
        // Predicated region
        $region41: #{tpu_custom_call.1} parent=31 // pred_check
          %p215 = pneg %p103
        $region42: #{tpu_custom_call.1} parent=31 // pred_check_branch
          %217 = sbr.rel (%p215) target = $region44
        $region43: #{tpu_custom_call.1} parent=31 // pred_region
          %218 = dma.done [#allocation6], 128
        $region44: #{tpu_custom_call.1} parent=31 // pred_fallthru
          _
        %s219 = sand.u32 %s43, 1
        %s220 = scalar_lea.sflag [#allocation3], %s219
        %s221 = sand.u32 %s43, 1
        %s222 = smul.addr %s221, 8
        %s223 = scalar_lea.vmem [#allocation2], %s222
        %p224 = pneg %p56
        %p225 = pneg %p53
        %p226 = pneg %p82
        %p227 = pneg %p79
        %p228 = pneg %p103
        %p229 = pneg %p100
        %p230 = pneg %p131
        %p231 = pneg %p128
        %s232 = sand.u32 %s118, 1
        %s233 = scalar_lea.sflag [#allocation4], %s232
        %s234 = sand.u32 %s118, 1
        %s235 = smul.addr %s234, 8
        %s236 = scalar_lea.vmem [#allocation8], %s235
        %v237 = vld [vmem:[%s206] sm:$0xff]
        %v238 = vld [vmem:[#allocation7] ss:$4 sm:$0x3]
        %s239 = scalar_lea.vmem [#allocation7], 1
        %v240 = vld [vmem:[%s239] ss:$4 sm:$0x3]
        %s241 = scalar_lea.vmem [#allocation7], 2
        %v242 = vld [vmem:[%s241] ss:$4 sm:$0x3]
        %s243 = scalar_lea.vmem [#allocation7], 3
        %v244 = vld [vmem:[%s243] ss:$4 sm:$0x3]
        %v246 = vlaneseq
        %v247 = vshrl.u32 %v246, 7
        %v248 = vsub.s32 0, %v247
        %v249 = vrot.slane %v238, %v248
        %v250 = vlaneseq
        %v251 = vshrl.u32 %v250, 7
        %v252 = vsub.s32 1, %v251
        %v253 = vrot.slane %v238, %v252
        %v254 = vcombine.low %v249, %v253
        %v256 = vmul.f32 %v237, %v254
        %v258 = vlaneseq
        %v259 = vshrl.u32 %v258, 7
        %v260 = vsub.s32 0, %v259
        %v261 = vrot.slane %v240, %v260
        %v262 = vlaneseq
        %v263 = vshrl.u32 %v262, 7
        %v264 = vsub.s32 1, %v263
        %v265 = vrot.slane %v240, %v264
        %v266 = vcombine.low %v261, %v265
        %v268 = vmul.f32 %v237, %v266
        %v269 = vld [vmem:[#allocation5] sm:$0xf]
        %271 = vset.pattern.permute.xlu0 4
        %272 = vperm.xlu0 %271, %v269
        %v273 = vpop.permute.xlu0 %272
        %v276 = vcombine.high %v237, %v237
        %v278 = vmul.f32 %v273, %v237
        %v279 = vmul.f32 %v273, %v276
        %v280 = vld [vmem:[#allocation5] sm:$0xf]
        %v282 = vcombine.high %v256, %v256
        %284 = vrot.lane.b32.xlu0 %v256, 1
        %v285 = vpop.permute.xlu0 %284
        %286 = vrot.lane.b32.xlu0 %v282, 1
        %v287 = vpop.permute.xlu0 %286
        %v288 = vlaneseq
        %v289 = vand.u32 %v288, 127
        %vm290 = vcmp.lt.s32.totalorder %v289, 1
        %v291 = vsel %vm290, %v285, %v287
        %v292 = vsel %vm290, %v287, %v285
        %294 = vset.pattern.permute.xlu0 3
        %295 = vperm.xlu0 %294, %v280
        %v296 = vpop.permute.xlu0 %295
        %v298 = vmul.f32 %v296, %v292
        %v299 = vmul.f32 %v296, %v291
        %v300 = vadd.f32 %v278, %v298
        %v301 = vadd.f32 %v279, %v299
        %v302 = vld [vmem:[#allocation5] sm:$0xf]
        %v304 = vcombine.high %v268, %v268
        %306 = vrot.lane.b32.xlu0 %v268, 127
        %v307 = vpop.permute.xlu0 %306
        %308 = vrot.lane.b32.xlu0 %v304, 127
        %v309 = vpop.permute.xlu0 %308
        %vm310 = vcmp.lt.s32.totalorder %v289, 127
        %v311 = vsel %vm310, %v307, %v309
        %v312 = vsel %vm310, %v309, %v307
        %314 = vset.pattern.permute.xlu0 5
        %315 = vperm.xlu0 %314, %v302
        %v316 = vpop.permute.xlu0 %315
        %v318 = vmul.f32 %v316, %v311
        %v319 = vmul.f32 %v316, %v312
        %v320 = vadd.f32 %v300, %v318
        %v321 = vadd.f32 %v301, %v319
        %v322 = vld [vmem:[#allocation5] sm:$0xf]
        %323 = vrot.lane.b32.xlu0 %v256, 17
        %v324 = vpop.permute.xlu0 %323
        %325 = vrot.lane.b32.xlu0 %v282, 17
        %v326 = vpop.permute.xlu0 %325
        %vm327 = vcmp.lt.s32.totalorder %v289, 17
        %v328 = vsel %vm327, %v324, %v326
        %v329 = vsel %vm327, %v326, %v324
        %331 = vset.pattern.permute.xlu0 0
        %332 = vperm.xlu0 %331, %v322
        %v333 = vpop.permute.xlu0 %332
        %v335 = vmul.f32 %v333, %v329
        %v336 = vmul.f32 %v333, %v328
        %v337 = vld [vmem:[#allocation5] sm:$0xf]
        %338 = vrot.lane.b32.xlu0 %v237, 16
        %v339 = vpop.permute.xlu0 %338
        %340 = vrot.lane.b32.xlu0 %v276, 16
        %v341 = vpop.permute.xlu0 %340
        %vm342 = vcmp.lt.s32.totalorder %v289, 16
        %v343 = vsel %vm342, %v339, %v341
        %v344 = vsel %vm342, %v341, %v339
        %346 = vset.pattern.permute.xlu0 1
        %347 = vperm.xlu0 %346, %v337
        %v348 = vpop.permute.xlu0 %347
        %v350 = vmul.f32 %v348, %v344
        %v351 = vmul.f32 %v348, %v343
        %v352 = vadd.f32 %v335, %v350
        %v353 = vadd.f32 %v336, %v351
        %v354 = vld [vmem:[#allocation5] sm:$0xf]
        %355 = vrot.lane.b32.xlu0 %v268, 15
        %v356 = vpop.permute.xlu0 %355
        %357 = vrot.lane.b32.xlu0 %v304, 15
        %v358 = vpop.permute.xlu0 %357
        %vm359 = vcmp.lt.s32.totalorder %v289, 15
        %v360 = vsel %vm359, %v356, %v358
        %v361 = vsel %vm359, %v358, %v356
        %363 = vset.pattern.permute.xlu0 2
        %364 = vperm.xlu0 %363, %v354
        %v365 = vpop.permute.xlu0 %364
        %v367 = vmul.f32 %v365, %v361
        %v368 = vmul.f32 %v365, %v360
        %v369 = vadd.f32 %v352, %v367
        %v370 = vadd.f32 %v353, %v368
        %v371 = vld [vmem:[#allocation5] sm:$0xf]
        %372 = vrot.lane.b32.xlu0 %v256, 113
        %v373 = vpop.permute.xlu0 %372
        %374 = vrot.lane.b32.xlu0 %v282, 113
        %v375 = vpop.permute.xlu0 %374
        %vm376 = vcmp.lt.s32.totalorder %v289, 113
        %v377 = vsel %vm376, %v373, %v375
        %v378 = vsel %vm376, %v375, %v373
        %380 = vset.pattern.permute.xlu0 6
        %381 = vperm.xlu0 %380, %v371
        %v382 = vpop.permute.xlu0 %381
        %v384 = vmul.f32 %v382, %v377
        %v385 = vmul.f32 %v382, %v378
        %v386 = vld [vmem:[#allocation5] sm:$0xf]
        %387 = vrot.lane.b32.xlu0 %v237, 112
        %v388 = vpop.permute.xlu0 %387
        %389 = vrot.lane.b32.xlu0 %v276, 112
        %v390 = vpop.permute.xlu0 %389
        %vm391 = vcmp.lt.s32.totalorder %v289, 112
        %v392 = vsel %vm391, %v388, %v390
        %v393 = vsel %vm391, %v390, %v388
        %395 = vset.pattern.permute.xlu0 7
        %396 = vperm.xlu0 %395, %v386
        %v397 = vpop.permute.xlu0 %396
        %v399 = vmul.f32 %v397, %v392
        %v400 = vmul.f32 %v397, %v393
        %v401 = vadd.f32 %v384, %v399
        %v402 = vadd.f32 %v385, %v400
        %v403 = vld [vmem:[#allocation5] sm:$0xf]
        %404 = vrot.lane.b32.xlu0 %v268, 111
        %v405 = vpop.permute.xlu0 %404
        %406 = vrot.lane.b32.xlu0 %v304, 111
        %v407 = vpop.permute.xlu0 %406
        %vm408 = vcmp.lt.s32.totalorder %v289, 111
        %v409 = vsel %vm408, %v405, %v407
        %v410 = vsel %vm408, %v407, %v405
        %412 = vset.pattern.permute.xlu0 8
        %413 = vperm.xlu0 %412, %v403
        %v414 = vpop.permute.xlu0 %413
        %v416 = vmul.f32 %v414, %v409
        %v417 = vmul.f32 %v414, %v410
        %v418 = vadd.f32 %v401, %v416
        %v419 = vadd.f32 %v402, %v417
        %v421 = vlaneseq
        %v422 = vshrl.u32 %v421, 7
        %v423 = vsub.s32 0, %v422
        %v424 = vrot.slane %v242, %v423
        %v425 = vlaneseq
        %v426 = vshrl.u32 %v425, 7
        %v427 = vsub.s32 1, %v426
        %v428 = vrot.slane %v242, %v427
        %v431 = vmul.f32 %v424, %v369
        %v432 = vmul.f32 %v428, %v370
        %v433 = vadd.f32 %v320, %v431
        %v434 = vadd.f32 %v321, %v432
        %v436 = vlaneseq
        %v437 = vshrl.u32 %v436, 7
        %v438 = vsub.s32 0, %v437
        %v439 = vrot.slane %v244, %v438
        %v440 = vlaneseq
        %v441 = vshrl.u32 %v440, 7
        %v442 = vsub.s32 1, %v441
        %v443 = vrot.slane %v244, %v442
        %v446 = vmul.f32 %v439, %v418
        %v447 = vmul.f32 %v443, %v419
        %v448 = vadd.f32 %v433, %v446
        %v449 = vadd.f32 %v434, %v447
        %v450 = vld [vmem:[#allocation5] sm:$0xf]
        %452 = vset.pattern.permute.xlu0 9
        %453 = vperm.xlu0 %452, %v450
        %v454 = vpop.permute.xlu0 %453
        %v456 = vadd.f32 %v448, %v454
        %v457 = vadd.f32 %v449, %v454
        %v460 = vcombine.low %v456, %v457
        %462 = vst [vmem:[%s236] sm:$0xff] %v460
        %s463 = sand.u32 %s118, 1
        %s464 = scalar_lea.sflag [#allocation4], %s463
        %s465 = sand.u32 %s118, 1
        %s466 = smul.addr %s465, 8
        %s467 = scalar_lea.vmem [#allocation8], %s466
        // Predicated region
        $region45: #{tpu_custom_call.1} parent=31 // pred_check
          %p468 = pneg %p128
        $region46: #{tpu_custom_call.1} parent=31 // pred_check_branch
          %470 = sbr.rel (%p468) target = $region48
        $region47: #{tpu_custom_call.1} parent=31 // pred_region
          %s472 = ssub.s32 128, 128
          %473 = vsyncadd %s464, %s472
          %s474 = smul.addr %s26, 2
          %s475 = smul.addr %s25, 2
          %s476 = sadd.s32 %s474, %s475
          %s477 = smul.addr %s476, 64
          %s478 = scalar_lea.hbm %s3, %s477
          %s480 = sshll.u32 %s467, 4
          %s481 = int_to_ptr.vmem [resolvable:$true] %s480
          %483 = dma.vmem_to_hbm [thread:$0]  %s481, 128, %s478, %s464
        $region48: #{tpu_custom_call.1} parent=31 // pred_fallthru
          _
      $region32: #{tpu_custom_call.1} parent=5 // pred_fallthru
        _
      %p484 = scmp.le.s32.totalorder 2, %s16
      // Predicated region
      $region49: #{tpu_custom_call.1} parent=5 // pred_check
        %p485 = pneg %p484
      $region50: #{tpu_custom_call.1} parent=5 // pred_check_branch
        %487 = sbr.rel (%p485) target = $region52
      $region51: #{tpu_custom_call.1} parent=5 // pred_region
        %s488 = ssub.s32 %s16, 2
        // Predicated region
        $region53: #{tpu_custom_call.1} parent=51 // pred_check
          %p489 = pneg %p134
        $region54: #{tpu_custom_call.1} parent=51 // pred_check_branch
          %491 = sbr.rel (%p489) target = $region56
        $region55: #{tpu_custom_call.1} parent=51 // pred_region
          %s492 = sand.u32 %s119, 1
          %s493 = scalar_lea.sflag [#allocation4], %s492
          %s494 = sand.u32 %s119, 1
          %s495 = smul.addr %s494, 8
          %s496 = scalar_lea.vmem [#allocation8], %s495
          %497 = dma.done %s493, 128
        $region56: #{tpu_custom_call.1} parent=51 // pred_fallthru
          _
      $region52: #{tpu_custom_call.1} parent=5 // pred_fallthru
        _
    $region6: #{tpu_custom_call.1} parent=1 // loop_footer
      %s20 = sadd.s32 1, %s16
    $region7: #{tpu_custom_call.1} parent=1 // loop_footer_branch
      %15 = sbr.rel target = $region3
    $region8: #{tpu_custom_call.1} parent=1 // loop_exit
      _
    %498 = vsyncpa [#allocation3], 1
    %s499 = scalar_lea.sflag [#allocation3], 1
    %500 = vsyncpa %s499, 1
    %501 = vsyncpa [#allocation6], 1
    %502 = vsyncpa [#allocation4], 1
    %s503 = scalar_lea.sflag [#allocation4], 1
    %504 = vsyncpa %s503, 1

</llo_original>
